<compile_context>
chip_gen: v5e
topology: v5e:2x2
jax: 0.10.0
libtpu: 0.0.40
codegen_flags: <defaults>
</compile_context>

<pallas_src>
import functools
import math

import jax
import jax.numpy as jnp
from jax.experimental import pallas as pl
from jax.experimental.pallas import tpu as pltpu

NEG_INF = -1e30  # stand-in for float('-inf') in additive attention masks


# --------------------------------------------------------------------------- helpers
def _vmem_limit_bytes():
    """Scoped-VMEM budget: generous on 128 MiB chips (v5e/v6e), conservative on v7x (64 MiB)."""
    cap = 128 * 1024 * 1024
    try:
        cap = int(getattr(pltpu.get_tpu_info(), "vmem_capacity_bytes", cap))
    except Exception:
        pass
    return int(min(max(cap - 24 * 1024 * 1024, 32 * 1024 * 1024), 112 * 1024 * 1024))


def _divisor_block(n, cap, align):
    """Largest divisor of n that is <= cap and a multiple of `align`; falls back to n."""
    best = None
    for d in range(1, n + 1):
        if n % d == 0 and d <= cap and d % align == 0:
            best = d
    return best if best is not None else n


def _pick_batch_block(batch, seq, target_tokens=256, max_tokens=2048):
    """Batch block BB: smallest divisor of batch with BB*seq >= target (MXU M-dim),
    within a token budget; otherwise keep >= 2 batch blocks so megacore (v7x) has work."""
    divs = [d for d in range(1, batch + 1) if batch % d == 0]
    for d in divs:
        if target_tokens <= d * seq <= max_tokens:
            return d
    cands = [d for d in divs if d <= max(1, batch // 2) and d * seq <= max_tokens]
    return cands[-1] if cands else 1


def _layer_norm(x, w, b, eps=1e-5):
    mean = jnp.mean(x, axis=-1, keepdims=True)
    var = jnp.mean(jnp.square(x - mean), axis=-1, keepdims=True)
    return (x - mean) * jax.lax.rsqrt(var + eps) * w + b


# --------------------------------------------------------------------------- linear (embedding / classifier)
def _linear_kernel(x_ref, w_ref, b_ref, o_ref):
    o_ref[...] = (jnp.dot(x_ref[...], w_ref[...],
                          preferred_element_type=jnp.float32) + b_ref[...])


def _linear(x2d, w, b, *, block_m=256, block_n=512):
    """x2d: (M, K) bf16, w: (K, N) bf16, b: (1, N) f32  ->  (M, N) f32."""
    M, K = x2d.shape
    N = w.shape[1]
    bm = _divisor_block(M, block_m, 8)
    bn = _divisor_block(N, block_n, 128)
    return pl.pallas_call(
        _linear_kernel,
        out_shape=jax.ShapeDtypeStruct((M, N), jnp.float32),
        grid=(M // bm, N // bn),
        in_specs=[pl.BlockSpec((bm, K), lambda i, j: (i, 0)),
                  pl.BlockSpec((K, bn), lambda i, j: (0, j)),
                  pl.BlockSpec((1, bn), lambda i, j: (0, j))],
        out_specs=pl.BlockSpec((bm, bn), lambda i, j: (i, j)),
        compiler_params=pltpu.CompilerParams(
            dimension_semantics=("parallel", "parallel"),
            vmem_limit_bytes=_vmem_limit_bytes()),
    )(x2d, w, b)


# --------------------------------------------------------------------------- decoder stack kernel
def _decoder_kernel(x0_ref, mem_ref, tpad_ref, mpad_ref,
                    sa_in_w_ref, sa_in_b_ref, sa_out_w_ref, sa_out_b_ref,
                    ca_q_w_ref, ca_q_b_ref, ca_kv_w_ref, ca_kv_b_ref,
                    ca_out_w_ref, ca_out_b_ref,
                    ln1_w_ref, ln1_b_ref, ln2_w_ref, ln2_b_ref,
                    ff1_w_ref, ff1_b_ref, ff2_w_ref, ff2_b_ref,
                    ln3_w_ref, ln3_b_ref,
                    out_ref, h_ref, tbias_ref, *, nhead, bb):
    l = pl.program_id(1)
    num_layers = pl.num_programs(1)
    _, T, E = x0_ref.shape
    S = mem_ref.shape[1]
    H = nhead
    dh = E // H
    N = bb * T
    scale = 1.0 / math.sqrt(dh)

    # --- once per batch block: load embedded tokens, build causal + padding bias ---
    @pl.when(l == 0)
    def _():
        h_ref[...] = x0_ref[...].reshape(N, E)
        row = jax.lax.broadcasted_iota(jnp.int32, (T, T), 0)
        col = jax.lax.broadcasted_iota(jnp.int32, (T, T), 1)
        causal = jnp.where(col <= row, 0.0, NEG_INF).astype(jnp.float32)
        tbias_ref[...] = causal[None, :, :] + tpad_ref[...]      # (bb, T, T)

    def heads(x2d, seq):
        # (bb*seq, E) -> (bb*H, seq, dh)   (lane slices + stack; free when dh % 128 == 0)
        x3 = x2d.reshape(bb, seq, E)
        return jnp.stack([x3[:, :, i * dh:(i + 1) * dh] for i in range(H)],
                         axis=1).reshape(bb * H, seq, dh).astype(jnp.bfloat16)

    def mha(q2d, k2d, v2d, kseq, out_w, out_b, bias):
        qh, kh, vh = heads(q2d, T), heads(k2d, kseq), heads(v2d, kseq)
        s = jnp.einsum('bqd,bkd->bqk', qh, kh,
                       preferred_element_type=jnp.float32) * scale
        s = (s.reshape(bb, H, T, kseq) + bias[:, None]).reshape(bb * H, T, kseq)
        s = s - jnp.max(s, axis=-1, keepdims=True)
        p = jnp.exp(s)
        # NOTE: fully-masked rows give 1/0 -> inf/NaN, matching PyTorch's behavior.
        p = p * pl.reciprocal(jnp.sum(p, axis=-1, keepdims=True), approx=True)
        o = jnp.einsum('bqk,bkd->bqd', p.astype(jnp.bfloat16), vh,
                       preferred_element_type=jnp.float32)
        o4 = o.reshape(bb, H, T, dh)
        o2 = jnp.concatenate([o4[:, i] for i in range(H)], axis=-1).reshape(N, E)
        return jnp.dot(o2.astype(jnp.bfloat16), out_w,
                       preferred_element_type=jnp.float32) + out_b

    h = h_ref[...]                                               # (bb*T, E) f32

    # --- self-attention (fused QKV projection) + add & LN -----------------------
    qkv = jnp.dot(h.astype(jnp.bfloat16), sa_in_w_ref[0],
                  preferred_element_type=jnp.float32) + sa_in_b_ref[0]
    sa = mha(qkv[:, :E], qkv[:, E:2 * E], qkv[:, 2 * E:], T,
             sa_out_w_ref[0], sa_out_b_ref[0], tbias_ref[...])
    h = _layer_norm(h + sa, ln1_w_ref[0], ln1_b_ref[0])

    # --- cross-attention (fused KV from bf16 memory) + add & LN -----------------
    q = jnp.dot(h.astype(jnp.bfloat16), ca_q_w_ref[0],
                preferred_element_type=jnp.float32) + ca_q_b_ref[0]
    kv = jnp.dot(mem_ref[...].reshape(bb * S, E), ca_kv_w_ref[0],
                 preferred_element_type=jnp.float32) + ca_kv_b_ref[0]
    ca = mha(q, kv[:, :E], kv[:, E:], S,
             ca_out_w_ref[0], ca_out_b_ref[0], mpad_ref[...])
    h = _layer_norm(h + ca, ln2_w_ref[0], ln2_b_ref[0])

    # --- ReLU FFN + add & LN -----------------------------------------------------
    f = jnp.maximum(jnp.dot(h.astype(jnp.bfloat16), ff1_w_ref[0],
                            preferred_element_type=jnp.float32) + ff1_b_ref[0], 0.0)
    f = jnp.dot(f.astype(jnp.bfloat16), ff2_w_ref[0],
                preferred_element_type=jnp.float32) + ff2_b_ref[0]
    h = _layer_norm(h + f, ln3_w_ref[0], ln3_b_ref[0])

    h_ref[...] = h

    @pl.when(l == num_layers - 1)
    def _():
        out_ref[...] = h.reshape(bb, T, E)


# --------------------------------------------------------------------------- wrapper
def transformer_decoder_adapter_forward(memory, tgt, params,
                                        memory_key_padding_mask=None,
                                        tgt_key_padding_mask=None):
    """memory: (B,S,E) f32, tgt: (B,T,V) one-hot/soft f32 -> logits (B,T,V) f32."""
    B, S, E = memory.shape
    _, T, V = tgt.shape
    L = params['sa_in_w'].shape[0]
    H = params['nhead']
    F = params['ff1_w'].shape[-1]

    bb = _pick_batch_block(B, T)
    vmem_limit = _vmem_limit_bytes()

    # Additive key-padding biases (tiny, f32; mask math never leaves f32).
    if tgt_key_padding_mask is not None:
        tpad = jnp.where(tgt_key_padding_mask, NEG_INF, 0.0)[:, None, :].astype(jnp.float32)
    else:
        tpad = jnp.zeros((B, 1, T), jnp.float32)
    if memory_key_padding_mask is not None:
        mpad = jnp.where(memory_key_padding_mask, NEG_INF, 0.0)[:, None, :].astype(jnp.float32)
    else:
        mpad = jnp.zeros((B, 1, S), jnp.float32)

    bf16 = lambda a: a.astype(jnp.bfloat16)
    f32 = lambda a: a.astype(jnp.float32)
    bias3 = lambda a: f32(a).reshape(L, 1, -1)

    # Split the cross-attention in_proj into Q and fused KV halves (host side).
    ca_q_w, ca_kv_w = params['ca_in_w'][:, :, :E], params['ca_in_w'][:, :, E:]
    ca_q_b, ca_kv_b = params['ca_in_b'][:, :E], params['ca_in_b'][:, E:]

    layer_ops = [
        bf16(params['sa_in_w']), bias3(params['sa_in_b']),
        bf16(params['sa_out_w']), bias3(params['sa_out_b']),
        bf16(ca_q_w), bias3(ca_q_b),
        bf16(ca_kv_w), bias3(ca_kv_b),
        bf16(params['ca_out_w']), bias3(params['ca_out_b']),
        bias3(params['ln1_w']), bias3(params['ln1_b']),
        bias3(params['ln2_w']), bias3(params['ln2_b']),
        bf16(params['ff1_w']), bias3(params['ff1_b']),
        bf16(params['ff2_w']), bias3(params['ff2_b']),
        bias3(params['ln3_w']), bias3(params['ln3_b']),
    ]

    # --- 1) text_embedding: Linear(V, E) ------------------------------------------
    # TODO(synk): for strictly one-hot tgt this could be a row gather of emb_w; kept
    # dense because decode() feeds softmax probabilities back into the embedding.
    x0 = _linear(bf16(tgt).reshape(B * T, V), bf16(params['emb_w']),
                 f32(params['emb_b']).reshape(1, E)).reshape(B, T, E)

    # --- 2) decoder stack ----------------------------------------------------------
    in_specs = ([pl.BlockSpec((bb, T, E), lambda b, l: (b, 0, 0)),   # embedded tgt (f32)
                 pl.BlockSpec((bb, S, E), lambda b, l: (b, 0, 0)),   # memory (bf16)
                 pl.BlockSpec((bb, 1, T), lambda b, l: (b, 0, 0)),   # tgt key-padding bias
                 pl.BlockSpec((bb, 1, S), lambda b, l: (b, 0, 0))]   # memory key-padding bias
                + [pl.BlockSpec((1,) + a.shape[1:], lambda b, l: (l, 0, 0))
                   for a in layer_ops])

    per_layer_flops = (2 * T * E * 3 * E + 4 * T * T * E + 2 * T * E * E        # self-attn
                       + 2 * T * E * E + 4 * S * E * E + 4 * T * S * E
                       + 2 * T * E * E                                          # cross-attn
                       + 4 * T * E * F)                                         # FFN
    cost = pl.CostEstimate(
        flops=int(B * L * per_layer_flops),
        transcendentals=int(B * L * H * (T * T + T * S)),
        bytes_accessed=int((B // bb) * sum(int(a.size) * a.dtype.itemsize for a in layer_ops)
                           + 8 * B * T * E + 2 * B * S * E))

    kernel = functools.partial(_decoder_kernel, nhead=H, bb=bb)

    h_out = pl.pallas_call(
        kernel,
        out_shape=jax.ShapeDtypeStruct((B, T, E), jnp.float32),
        grid=(B // bb, L),
        in_specs=in_specs,
        out_specs=pl.BlockSpec((bb, T, E), lambda b, l: (b, 0, 0)),
        scratch_shapes=[pltpu.VMEM((bb * T, E), jnp.float32),   # h carried across layers
                        pltpu.VMEM((bb, T, T), jnp.float32)],   # causal + padding bias
        compiler_params=pltpu.CompilerParams(
            dimension_semantics=("parallel", "arbitrary"),
            vmem_limit_bytes=vmem_limit),
        cost_estimate=cost,
    )(x0, bf16(memory), tpad, mpad, *layer_ops)

    # --- 3) text_classifier: Linear(E, V), V tiled on the 2nd grid axis ------------
    logits = _linear(bf16(h_out).reshape(B * T, E), bf16(params['cls_w']),
                     f32(params['cls_b']).reshape(1, V)).reshape(B, T, V)
    return logits


# --------------------------------------------------------------------------- synthetic params
def init_params(key, vocab_size, d_model, nhead, dim_ff, num_layers):
    """Deterministic synthetic weights.  All linear weights stored pre-transposed as (in, out).
    (Loading real PyTorch checkpoints requires transposing nn.Linear / in_proj weights.)"""
    ks = jax.random.split(key, 16)

    def w(k, shape, scale=0.05):
        return (scale * jax.random.normal(k, shape)).astype(jnp.float32)

    E, V, F, L = d_model, vocab_size, dim_ff, num_layers
    ones = lambda s: jnp.ones(s, jnp.float32)
    zeros = lambda s: jnp.zeros(s, jnp.float32)
    return dict(
        nhead=nhead,
        emb_w=w(ks[0], (V, E)),          emb_b=w(ks[1], (E,)),
        sa_in_w=w(ks[2], (L, E, 3 * E)), sa_in_b=w(ks[3], (L, 3 * E)),
        sa_out_w=w(ks[4], (L, E, E)),    sa_out_b=w(ks[5], (L, E)),
        ca_in_w=w(ks[6], (L, E, 3 * E)), ca_in_b=w(ks[7], (L, 3 * E)),
        ca_out_w=w(ks[8], (L, E, E)),    ca_out_b=w(ks[9], (L, E)),
        ln1_w=ones((L, E)), ln1_b=zeros((L, E)),
        ln2_w=ones((L, E)), ln2_b=zeros((L, E)),
        ln3_w=ones((L, E)), ln3_b=zeros((L, E)),
        ff1_w=w(ks[10], (L, E, F)), ff1_b=w(ks[11], (L, F)),
        ff2_w=w(ks[12], (L, F, E)), ff2_b=w(ks[13], (L, E)),
        cls_w=w(ks[14], (E, V)),    cls_b=w(ks[15], (V,)),
    )


if __name__ == "__main__":
    # Small but lane-friendly demo shapes (last dims multiples of 128, T multiple of 8).
    B, S, T = 4, 16, 8          # batch, memory length, target length
    E, H, F = 128, 4, 256       # d_model, nhead, dim_feedforward
    V, L = 128, 2               # vocab size, num decoder layers

    key = jax.random.PRNGKey(0)
    k_mem, k_tok, k_par = jax.random.split(key, 3)

    memory = jax.random.normal(k_mem, (B, S, E), dtype=jnp.float32)
    tok_ids = jax.random.randint(k_tok, (B, T), 0, V)
    tgt_onehot = jax.nn.one_hot(tok_ids, V, dtype=jnp.float32)   # tgt is (B, T, V)

    params = init_params(k_par, V, E, H, F, L)

    logits = transformer_decoder_adapter_forward(memory, tgt_onehot, params)
    logits = jax.block_until_ready(logits)

    assert logits.shape == (B, T, V) and logits.dtype == jnp.float32
    assert bool(jnp.all(jnp.isfinite(logits)))
    print("KERNEL_OK")
</pallas_src>

<mosaic_0001>
module attributes {stable_mosaic.version = 11 : i64} {
  func.func @_linear_kernel(%arg0: i32, %arg1: i32, %arg2: memref<32x128xbf16, #tpu.memory_space<vmem>>, %arg3: memref<128x128xbf16, #tpu.memory_space<vmem>>, %arg4: memref<1x128xf32, #tpu.memory_space<vmem>>, %arg5: memref<32x128xf32, #tpu.memory_space<vmem>>) attributes {dimension_semantics = [#tpu.dimension_semantics<parallel>, #tpu.dimension_semantics<parallel>], iteration_bounds = array<i64: 1, 1>, scalar_prefetch = 0 : i64, scratch_operands = 0 : i64, tpu.core_type = #tpu.core_type<tc>, window_params = [{transform_indices = @transform_0, window_bounds = array<i64: 32, 128>}, {transform_indices = @transform_1, window_bounds = array<i64: 128, 128>}, {transform_indices = @transform_2, window_bounds = array<i64: 1, 128>}, {transform_indices = @transform_3, window_bounds = array<i64: 32, 128>}]} {
    %c0 = arith.constant 0 : index
    %c0_0 = arith.constant 0 : index
    %0 = vector.load %arg2[%c0, %c0_0] : memref<32x128xbf16, #tpu.memory_space<vmem>>, vector<32x128xbf16>
    %c0_1 = arith.constant 0 : index
    %c0_2 = arith.constant 0 : index
    %1 = vector.load %arg3[%c0_1, %c0_2] : memref<128x128xbf16, #tpu.memory_space<vmem>>, vector<128x128xbf16>
    %cst = arith.constant dense<0.000000e+00> : vector<32x128xf32>
    %2 = tpu.matmul %0, %1, %cst {dimension_numbers = #tpu.dot_dimension_numbers<[1], [0], [0], [1], [0, 0, 1, 1], [], []>} : vector<32x128xbf16>, vector<128x128xbf16>, vector<32x128xf32> -> vector<32x128xf32>
    %c0_3 = arith.constant 0 : index
    %c0_4 = arith.constant 0 : index
    %3 = vector.load %arg4[%c0_3, %c0_4] : memref<1x128xf32, #tpu.memory_space<vmem>>, vector<1x128xf32>
    %4 = vector.broadcast %3 : vector<1x128xf32> to vector<32x128xf32>
    %5 = arith.addf %2, %4 : vector<32x128xf32>
    %c0_5 = arith.constant 0 : index
    %c0_6 = arith.constant 0 : index
    %6 = vector.load %arg5[%c0_5, %c0_6] : memref<32x128xf32, #tpu.memory_space<vmem>>, vector<32x128xf32>
    tpu.vector_store %arg5[%c0_5, %c0_6], %5 {strides = array<i32>} : memref<32x128xf32, #tpu.memory_space<vmem>>, vector<32x128xf32>,
    return
  }
  func.func @transform_0(%arg0: i32, %arg1: i32) -> (i32, i32) {
    %c0_i32 = arith.constant 0 : i32
    %c0_i32_0 = arith.constant 0 : i32
    return %arg0, %c0_i32 : i32, i32
  }
  func.func @transform_1(%arg0: i32, %arg1: i32) -> (i32, i32) {
    %c0_i32 = arith.constant 0 : i32
    %c0_i32_0 = arith.constant 0 : i32
    return %c0_i32, %arg1 : i32, i32
  }
  func.func @transform_2(%arg0: i32, %arg1: i32) -> (i32, i32) {
    %c0_i32 = arith.constant 0 : i32
    %c0_i32_0 = arith.constant 0 : i32
    return %c0_i32, %arg1 : i32, i32
  }
  func.func @transform_3(%arg0: i32, %arg1: i32) -> (i32, i32) {
    %c0_i32 = arith.constant 0 : i32
    return %arg0, %arg1 : i32, i32
  }
}

</mosaic_0001>

<llo_original>
// kernel: tpu_custom_call.1
$region0: #{tpu_custom_call.1}
  #allocation0 [shape = 'u32[]', space=smem, size = 0x4, offset = 0x4, fixed_abs, tag = 'smem constant byte address 0x4 - core index']
  #allocation1 [shape = 'u32[72,128]{1,0:T(1,128)}', space=vmem, size = 0x9000, scoped, tag = 'internal scratch']
  %s0 = inlined_call_operand.hbm [shape: bf16[32,128], index: 0, kind: input, shape index: {}]
  %s1 = inlined_call_operand.hbm [shape: bf16[128,128], index: 1, kind: input, shape index: {}]
  %s2 = inlined_call_operand.vmem [shape: f32[1,128], index: 2, kind: input, shape index: {}]
  %s3 = inlined_call_operand.hbm [shape: f32[32,128], index: 3, kind: output, shape index: {}]
  %s4 = sld [smem:[#allocation0]]
  $region30: #{tpu_custom_call.1} parent=0
    _
  %s6 = ssub.s32 1, %s4
  %s7 = scalar_select 0, %s6, %s4
  $region1: #{tpu_custom_call.1} parent=0
    #allocation2 [shape = 'u8[8192]{0}', space=vmem, size = 0x2000, scoped, tag = 'input window, operand 0, single buffered']
    #allocation3 [shape = 's32[1]{0}', space=sflag, size = 0x4, scoped, tag = 'scoped memory for tpu_custom_call.1']
    #allocation4 [shape = 's32[1]{0}', space=sflag, size = 0x4, scoped, tag = 'scoped memory for tpu_custom_call.1']
    #allocation5 [shape = 'u8[32768]{0}', space=vmem, size = 0x8000, scoped, tag = 'input window, operand 1, single buffered']
    #allocation6 [shape = 's32[1]{0}', space=sflag, size = 0x4, scoped, tag = 'scoped memory for tpu_custom_call.1']
    #allocation7 [shape = 'u8[16384]{0}', space=vmem, size = 0x4000, scoped, tag = 'output window, operand 0, single buffered']
    %8 = vsyncpa [#allocation3], 0
    %9 = vsyncpa [#allocation6], 0
    %10 = vsyncpa [#allocation4], 0
    // Predicated region
    $region2: #{tpu_custom_call.1} parent=1 // pred_check
      _
    $region3: #{tpu_custom_call.1} parent=1 // pred_check_branch
      %12 = sbr.rel (0) target = $region5
    $region4: #{tpu_custom_call.1} parent=1 // pred_region
      %14 = vsyncadd [#allocation3], 0
      %s15 = sshll.u32 %s0, 4
      %s16 = int_to_ptr.hbm [resolvable:$true] %s15
      %s17 = sshll.u32 [#allocation2], 4
      %s18 = int_to_ptr.vmem [resolvable:$true] %s17
      %23 = dma.hbm_to_vmem [thread:$0]  %s16, 256, %s18, [#allocation3], 64, 64, 4
    $region5: #{tpu_custom_call.1} parent=1 // pred_fallthru
      _
    // Predicated region
    $region6: #{tpu_custom_call.1} parent=1 // pred_check
      _
    $region7: #{tpu_custom_call.1} parent=1 // pred_check_branch
      %25 = sbr.rel (0) target = $region9
    $region8: #{tpu_custom_call.1} parent=1 // pred_region
      %27 = vsyncadd [#allocation6], 0
      %s28 = sshll.u32 %s1, 4
      %s29 = int_to_ptr.hbm [resolvable:$true] %s28
      %s30 = sshll.u32 [#allocation5], 4
      %s31 = int_to_ptr.vmem [resolvable:$true] %s30
      %36 = dma.hbm_to_vmem [thread:$0]  %s29, 1024, %s31, [#allocation6], 64, 64, 4
    $region9: #{tpu_custom_call.1} parent=1 // pred_fallthru
      _
    // Predicated region
    $region10: #{tpu_custom_call.1} parent=1 // pred_check
      _
    $region11: #{tpu_custom_call.1} parent=1 // pred_check_branch
      %38 = sbr.rel (0) target = $region13
    $region12: #{tpu_custom_call.1} parent=1 // pred_region
      _
    $region13: #{tpu_custom_call.1} parent=1 // pred_fallthru
      _
    // Predicated region
    $region14: #{tpu_custom_call.1} parent=1 // pred_check
      _
    $region15: #{tpu_custom_call.1} parent=1 // pred_check_branch
      %40 = sbr.rel (0) target = $region17
    $region16: #{tpu_custom_call.1} parent=1 // pred_region
      %42 = dma.done [#allocation3], 256
    $region17: #{tpu_custom_call.1} parent=1 // pred_fallthru
      _
    // Predicated region
    $region18: #{tpu_custom_call.1} parent=1 // pred_check
      _
    $region19: #{tpu_custom_call.1} parent=1 // pred_check_branch
      %44 = sbr.rel (0) target = $region21
    $region20: #{tpu_custom_call.1} parent=1 // pred_region
      %46 = dma.done [#allocation6], 1024
    $region21: #{tpu_custom_call.1} parent=1 // pred_fallthru
      _
    %v47 = vld [vmem:[#allocation2] sm:$0xf]
    %v48 = vld [vmem:[#allocation2 + $0x4] sm:$0xf]
    %v49 = vld [vmem:[#allocation2 + $0x8] sm:$0xf]
    %v50 = vld [vmem:[#allocation2 + $0xc] sm:$0xf]
    %v51 = vld [vmem:[#allocation5] sm:$0xf]
    %v52 = vld [vmem:[#allocation5 + $0x4] sm:$0xf]
    %v53 = vld [vmem:[#allocation5 + $0x8] sm:$0xf]
    %v54 = vld [vmem:[#allocation5 + $0xc] sm:$0xf]
    %v55 = vld [vmem:[#allocation5 + $0x10] sm:$0xf]
    %v56 = vld [vmem:[#allocation5 + $0x14] sm:$0xf]
    %v57 = vld [vmem:[#allocation5 + $0x18] sm:$0xf]
    %v58 = vld [vmem:[#allocation5 + $0x1c] sm:$0xf]
    %v59 = vld [vmem:[#allocation5 + $0x20] sm:$0xf]
    %v60 = vld [vmem:[#allocation5 + $0x24] sm:$0xf]
    %v61 = vld [vmem:[#allocation5 + $0x28] sm:$0xf]
    %v62 = vld [vmem:[#allocation5 + $0x2c] sm:$0xf]
    %v63 = vld [vmem:[#allocation5 + $0x30] sm:$0xf]
    %v64 = vld [vmem:[#allocation5 + $0x34] sm:$0xf]
    %v65 = vld [vmem:[#allocation5 + $0x38] sm:$0xf]
    %v66 = vld [vmem:[#allocation5 + $0x3c] sm:$0xf]
    %v67 = vld [vmem:[%s2] sm:$0x1]
    %v69 = vperm.slane %v67, 0
    %v75 = vunpack.c.l.b16 %v47
    %v76 = vunpack.c.l.b16 %v48
    %v77 = vunpack.c.l.b16 %v49
    %v78 = vunpack.c.l.b16 %v50
    %v79 = vpack.c.b16 %v76, %v75
    %v80 = vpack.c.b16 %v78, %v77
    %v99 = vunpack.c.l.b16 %v51
    %v100 = vunpack.c.l.b16 %v52
    %v101 = vunpack.c.l.b16 %v53
    %v102 = vunpack.c.l.b16 %v54
    %v103 = vunpack.c.l.b16 %v55
    %v104 = vunpack.c.l.b16 %v56
    %v105 = vunpack.c.l.b16 %v57
    %v106 = vunpack.c.l.b16 %v58
    %v107 = vunpack.c.l.b16 %v59
    %v108 = vunpack.c.l.b16 %v60
    %v109 = vunpack.c.l.b16 %v61
    %v110 = vunpack.c.l.b16 %v62
    %v111 = vunpack.c.l.b16 %v63
    %v112 = vunpack.c.l.b16 %v64
    %v113 = vunpack.c.l.b16 %v65
    %v114 = vunpack.c.l.b16 %v66
    %v115 = vpack.c.b16 %v100, %v99
    %v116 = vpack.c.b16 %v102, %v101
    %v117 = vpack.c.b16 %v104, %v103
    %v118 = vpack.c.b16 %v106, %v105
    %v119 = vpack.c.b16 %v108, %v107
    %v120 = vpack.c.b16 %v110, %v109
    %v121 = vpack.c.b16 %v112, %v111
    %v122 = vpack.c.b16 %v114, %v113
    %131 = vmatpush.bf16.msra.mxu0 %v122
    %132 = vmatpush.bf16.msra.mxu0 %v121
    %133 = vmatpush.bf16.msra.mxu0 %v120
    %134 = vmatpush.bf16.msra.mxu0 %v119
    %135 = vmatpush.bf16.msra.mxu0 %v118
    %136 = vmatpush.bf16.msra.mxu0 %v117
    %137 = vmatpush.bf16.msra.mxu0 %v116
    %138 = vmatpush.bf16.msra.mxu0 %v115
    %139 = vmatmul.bf16.gmra.mxu0 %v79
    %v140 = vpop.f32.mrf.mxu0
    %v141 = vadd.f32 %v69, %v140
    %v142 = vpop.f32.mrf.mxu0
    %v143 = vadd.f32 %v69, %v142
    %144 = vmatmul.bf16.gmra.mxu0 %v80
    %v145 = vpop.f32.mrf.mxu0
    %v146 = vadd.f32 %v69, %v145
    %v147 = vpop.f32.mrf.mxu0
    %v148 = vadd.f32 %v69, %v147
    %149 = vdwg.mxu0
    %150 = vst [vmem:[#allocation7] sm:$0xff] %v141
    %151 = vst [vmem:[#allocation7 + $0x8] sm:$0xff] %v143
    %152 = vst [vmem:[#allocation7 + $0x10] sm:$0xff] %v146
    %153 = vst [vmem:[#allocation7 + $0x18] sm:$0xff] %v148
    // Predicated region
    $region22: #{tpu_custom_call.1} parent=1 // pred_check
      _
    $region23: #{tpu_custom_call.1} parent=1 // pred_check_branch
      %155 = sbr.rel (0) target = $region25
    $region24: #{tpu_custom_call.1} parent=1 // pred_region
      %157 = vsyncadd [#allocation4], 0
      %s158 = sshll.u32 [#allocation7], 4
      %s159 = int_to_ptr.vmem [resolvable:$true] %s158
      %s160 = sshll.u32 %s3, 4
      %s161 = int_to_ptr.hbm [resolvable:$true] %s160
      %166 = dma.vmem_to_hbm [thread:$0]  %s159, 512, %s161, [#allocation4], 128, 128, 8
    $region25: #{tpu_custom_call.1} parent=1 // pred_fallthru
      _
    // Predicated region
    $region26: #{tpu_custom_call.1} parent=1 // pred_check
      _
    $region27: #{tpu_custom_call.1} parent=1 // pred_check_branch
      %168 = sbr.rel (0) target = $region29
    $region28: #{tpu_custom_call.1} parent=1 // pred_region
      %170 = dma.done [#allocation4], 512
    $region29: #{tpu_custom_call.1} parent=1 // pred_fallthru
      _
    %171 = vsyncpa [#allocation3], 1
    %172 = vsyncpa [#allocation6], 1
    %173 = vsyncpa [#allocation4], 1

</llo_original>
